<compile_context>
chip_gen: v7x
topology: tpu7x:2x2x1
jax: 0.10.0
libtpu: 0.0.40
codegen_flags: <defaults>
</compile_context>

<pallas_src>
import functools

import jax
import jax.numpy as jnp
from jax.experimental import pallas as pl
from jax.experimental.pallas import tpu as pltpu

BALANCING_FACTOR = 0.5

# Rough count of live (TILE_N, C) f32-equivalent temporaries inside the kernel
# body (cast input, iota/compare/select, x-m, exp, ex*(x-m)); used for the
# VMEM budget so large tiles stay spill-free on v7x's 64 MiB.
_F32_TEMPS = 6


def _cce_kernel(x_ref, y_ref, out_ref, *, total_n):
    """Emit per-grid-step partials: out[0,0]=sum CE rows, out[0,1]=sum comp rows."""
    i = pl.program_id(0)

    x = x_ref[...].astype(jnp.float32)          # (tn, c); cast-on-load is free on VPU
    y = y_ref[...]                              # (tn, 1) int32 labels
    tn, c = x.shape

    # ---- per-element work (only piece that scales with C) -------------------
    col = jax.lax.broadcasted_iota(jnp.int32, (tn, c), 1)
    is_target = col == y
    # Target-class logit via select-reduce (no f32 one-hot materialized).
    logit_y = jnp.sum(jnp.where(is_target, x, 0.0), axis=-1, keepdims=True)

    m = jnp.max(x, axis=-1, keepdims=True)
    xm = x - m
    ex = jnp.exp(xm)
    sumex = jnp.sum(ex, axis=-1, keepdims=True)
    moment = jnp.sum(ex * xm, axis=-1, keepdims=True)     # sum_j e^{x_j-m}(x_j-m)

    # ---- per-row scalar algebra (exact divisions: cancellation-sensitive) ---
    ls = jnp.log(sumex)
    lse = m + ls                                           # log-sum-exp per row
    inv_sum = 1.0 / sumex                                  # exact; per-row only
    mean_shift = moment * inv_sum - ls                     # = sum_j p_j (x_j - lse)

    Yg = jnp.exp(logit_y - lse)                            # softmax(x)[i, y_i], exact path
    den = 1.0 - Yg + 1e-4
    inv_den = 1.0 / den                                    # exact (den can be ~1e-4)
    log_den = jnp.log(den)

    # sum_{j != y} Px_j * log(Px_j), with log(Px_j) = (x_j - lse) - log_den:
    #   full sum over all classes minus the target-class term, all per row.
    full = mean_shift - log_den
    tgt = Yg * ((logit_y - lse) - log_den)
    comp_row = (full - tgt) * inv_den
    ce_row = lse - logit_y                                 # -log softmax at target

    # Ragged last tile: SELECT per row (never multiply) so NaN/Inf in padded
    # garbage rows cannot leak into the partial sums.
    row = i * tn + jax.lax.broadcasted_iota(jnp.int32, (tn, 1), 0)
    valid = row < total_n
    ce_row = jnp.where(valid, ce_row, 0.0)
    comp_row = jnp.where(valid, comp_row, 0.0)

    out_ref[0, 0] = jnp.sum(ce_row)
    out_ref[0, 1] = jnp.sum(comp_row)


def _tpu_vmem_capacity():
    try:
        return int(pltpu.get_tpu_info().vmem_capacity_bytes)
    except Exception:
        return 64 << 20                      # assume smallest per-core VMEM (v7x)


def _pick_tile_n(n, c, itemsize, vmem_cap, max_tile=8192):
    """Largest row tile whose full VMEM footprint (double-buffered input block
    plus in-kernel f32 temporaries) fits a generation-aware budget."""
    budget = min(40 << 20, (vmem_cap * 3) // 5)            # <= ~40 MiB even on v7x
    bytes_per_row = c * (2 * itemsize + 4 * _F32_TEMPS) + 8  # + labels
    sub = 8 * max(1, 4 // itemsize)          # sublane mult: 8 f32 / 16 bf16 / 32 int8
    if sub * bytes_per_row > budget:
        # TODO(synk): stream over C (second "arbitrary" grid axis, online softmax).
        raise ValueError(
            f"CCE Pallas kernel: class dim C={c} is too large for a single "
            f"({sub}, {c}) VMEM block (budget {budget >> 20} MiB); reduce C or "
            "add C-axis streaming.")
    t = budget // bytes_per_row
    t = int(max(sub, min(max_tile, t)))
    t = max(sub, (t // sub) * sub)
    return n if n <= t else t


def cce_loss(yHat, y, balancing_factor=BALANCING_FACTOR, tile_n=None):
    """yHat: (N, C) float logits (any float dtype, streamed natively);
    y: (N,) int labels.  Returns a scalar f32 loss matching the PyTorch CCE."""
    n, c = yHat.shape
    y2d = y.astype(jnp.int32).reshape(n, 1)
    itemsize = jnp.dtype(yHat.dtype).itemsize
    vmem_cap = _tpu_vmem_capacity()
    if tile_n is None:
        tile_n = _pick_tile_n(n, c, itemsize, vmem_cap)
    tile_n = min(tile_n, n)
    grid_n = pl.cdiv(n, tile_n)

    kernel = functools.partial(_cce_kernel, total_n=n)

    cost = pl.CostEstimate(
        flops=7 * n * c,
        transcendentals=n * c + 5 * n,
        bytes_accessed=n * c * itemsize + n * 4 + grid_n * 8,
    )

    # Scoped-VMEM limit: double-buffered logits block + labels + f32 temps
    # + headroom, always kept below the v7x 64 MiB physical per-core VMEM.
    req = (2 * tile_n * c * itemsize + 2 * tile_n * 4
           + _F32_TEMPS * tile_n * c * 4 + (2 << 20))
    vmem_limit = int(min(56 << 20, max(req, 32 << 20)))

    partials = pl.pallas_call(
        kernel,
        out_shape=jax.ShapeDtypeStruct((grid_n, 2), jnp.float32),
        grid=(grid_n,),
        in_specs=[
            pl.BlockSpec((tile_n, c), lambda i: (i, 0)),   # logits tile (VMEM)
            pl.BlockSpec((tile_n, 1), lambda i: (i, 0)),   # labels tile (VMEM)
        ],
        # One (1, 2) partial per grid step -> no cross-step carried state, so
        # the N axis is "parallel" (shards across v7x's 2 TensorCores).
        out_specs=pl.BlockSpec((1, 2), lambda i: (i, 0),
                               memory_space=pltpu.SMEM),
        compiler_params=pltpu.CompilerParams(
            dimension_semantics=("parallel",),
            vmem_limit_bytes=vmem_limit,
        ),
        cost_estimate=cost,
    )(yHat, y2d)

    ce = jnp.sum(partials[:, 0]) / jnp.float32(n)
    comp = jnp.sum(partials[:, 1]) / jnp.float32(n * c)
    return ce - jnp.float32(balancing_factor) * comp


def _cce_ref(yHat, y, balancing_factor=BALANCING_FACTOR):
    # Pure-JAX reference mirroring the PyTorch module.
    n, c = yHat.shape
    yHat = yHat.astype(jnp.float32)
    logp = jax.nn.log_softmax(yHat, axis=1)
    ce = -jnp.mean(logp[jnp.arange(n), y])
    p = jax.nn.softmax(yHat, axis=1)
    Yg = p[jnp.arange(n), y][:, None]
    Px = p / (1.0 - Yg + 1e-4)
    Px_log = jnp.log(Px + 1e-10)
    zerohot = 1.0 - jax.nn.one_hot(y, c)
    comp = jnp.sum(Px * Px_log * zerohot) / (n * c)
    return ce - balancing_factor * comp


if __name__ == "__main__":
    key = jax.random.PRNGKey(0)
    k1, k2, k3, k4 = jax.random.split(key, 4)

    # Small shape consistent with the module: a batch of class logits.
    N, C = 8, 32
    yHat = jax.random.normal(k1, (N, C), dtype=jnp.float32)
    y = jax.random.randint(k2, (N,), 0, C, dtype=jnp.int32)
    loss = cce_loss(yHat, y)
    jax.block_until_ready(loss)
    ref = _cce_ref(yHat, y)
    assert jnp.allclose(loss, ref, atol=1e-4, rtol=1e-4), (loss, ref)

    # Exercise the row-tiled / ragged-last-tile / per-step-partials path.
    N2, C2 = 20, 128
    yHat2 = jax.random.normal(k3, (N2, C2), dtype=jnp.float32)
    y2 = jax.random.randint(k4, (N2,), 0, C2, dtype=jnp.int32)
    loss2 = cce_loss(yHat2, y2, tile_n=8)
    jax.block_until_ready(loss2)
    ref2 = _cce_ref(yHat2, y2)
    assert jnp.allclose(loss2, ref2, atol=1e-4, rtol=1e-4), (loss2, ref2)

    # bf16 logits streamed in their native dtype (cast-on-load inside kernel),
    # tile rounded to the bf16 sublane multiple.
    yHat3 = yHat2.astype(jnp.bfloat16)
    loss3 = cce_loss(yHat3, y2, tile_n=16)
    jax.block_until_ready(loss3)
    ref3 = _cce_ref(yHat3.astype(jnp.float32), y2)
    assert jnp.allclose(loss3, ref3, atol=1e-3, rtol=1e-3), (loss3, ref3)

    print("KERNEL_OK")
</pallas_src>

<mosaic_0001>
module attributes {stable_mosaic.version = 11 : i64} {
  func.func @_cce_kernel(%arg0: i32, %arg1: memref<8x32xf32, #tpu.memory_space<vmem>>, %arg2: memref<8x1xi32, #tpu.memory_space<vmem>>, %arg3: memref<1x2xf32, #tpu.memory_space<smem>>) attributes {dimension_semantics = [#tpu.dimension_semantics<parallel>], iteration_bounds = array<i64: 1>, scalar_prefetch = 0 : i64, scratch_operands = 0 : i64, tpu.core_type = #tpu.core_type<tc>, window_params = [{transform_indices = @transform_0, window_bounds = array<i64: 8, 32>}, {transform_indices = @transform_1, window_bounds = array<i64: 8, 1>}, {transform_indices = @transform_2, window_bounds = array<i64: 1, 2>}]} {
    %c0 = arith.constant 0 : index
    %c0_0 = arith.constant 0 : index
    %0 = vector.load %arg1[%c0, %c0_0] : memref<8x32xf32, #tpu.memory_space<vmem>>, vector<8x32xf32>
    %c0_1 = arith.constant 0 : index
    %c0_2 = arith.constant 0 : index
    %1 = vector.load %arg2[%c0_1, %c0_2] : memref<8x1xi32, #tpu.memory_space<vmem>>, vector<8x1xi32>
    %2 = tpu.iota {dimensions = array<i32: 1>} : vector<8x32xi32>
    %3 = vector.broadcast %1 : vector<8x1xi32> to vector<8x32xi32>
    %4 = arith.cmpi eq, %2, %3 : vector<8x32xi32>
    %cst = arith.constant 0.000000e+00 : f32
    %5 = vector.broadcast %cst : f32 to vector<8x32xf32>
    %6 = arith.select %4, %0, %5 : vector<8x32xi1>, vector<8x32xf32>
    %cst_3 = arith.constant dense<0.000000e+00> : vector<8xf32>
    %7 = vector.multi_reduction <add>, %6, %cst_3 [1] : vector<8x32xf32> to vector<8xf32>
    %8 = vector.shape_cast %7 : vector<8xf32> to vector<8x1xf32>
    %cst_4 = arith.constant dense<0xFF800000> : vector<8xf32>
    %9 = vector.multi_reduction <maximumf>, %0, %cst_4 [1] : vector<8x32xf32> to vector<8xf32>
    %10 = vector.shape_cast %9 : vector<8xf32> to vector<8x1xf32>
    %11 = vector.broadcast %10 : vector<8x1xf32> to vector<8x32xf32>
    %12 = arith.subf %0, %11 : vector<8x32xf32>
    %13 = math.exp %12 : vector<8x32xf32>
    %cst_5 = arith.constant dense<0.000000e+00> : vector<8xf32>
    %14 = vector.multi_reduction <add>, %13, %cst_5 [1] : vector<8x32xf32> to vector<8xf32>
    %15 = vector.shape_cast %14 : vector<8xf32> to vector<8x1xf32>
    %16 = arith.mulf %13, %12 : vector<8x32xf32>
    %cst_6 = arith.constant dense<0.000000e+00> : vector<8xf32>
    %17 = vector.multi_reduction <add>, %16, %cst_6 [1] : vector<8x32xf32> to vector<8xf32>
    %18 = vector.shape_cast %17 : vector<8xf32> to vector<8x1xf32>
    %19 = math.log %15 : vector<8x1xf32>
    %20 = arith.addf %10, %19 : vector<8x1xf32>
    %cst_7 = arith.constant 1.000000e+00 : f32
    %21 = vector.broadcast %cst_7 : f32 to vector<8x1xf32>
    %22 = arith.divf %21, %15 : vector<8x1xf32>
    %23 = arith.mulf %18, %22 : vector<8x1xf32>
    %24 = arith.subf %23, %19 : vector<8x1xf32>
    %25 = arith.subf %8, %20 : vector<8x1xf32>
    %26 = math.exp %25 : vector<8x1xf32>
    %cst_8 = arith.constant 1.000000e+00 : f32
    %27 = vector.broadcast %cst_8 : f32 to vector<8x1xf32>
    %28 = arith.subf %27, %26 : vector<8x1xf32>
    %cst_9 = arith.constant 9.99999974E-5 : f32
    %29 = vector.broadcast %cst_9 : f32 to vector<8x1xf32>
    %30 = arith.addf %28, %29 : vector<8x1xf32>
    %cst_10 = arith.constant 1.000000e+00 : f32
    %31 = vector.broadcast %cst_10 : f32 to vector<8x1xf32>
    %32 = arith.divf %31, %30 : vector<8x1xf32>
    %33 = math.log %30 : vector<8x1xf32>
    %34 = arith.subf %24, %33 : vector<8x1xf32>
    %35 = arith.subf %8, %20 : vector<8x1xf32>
    %36 = arith.subf %35, %33 : vector<8x1xf32>
    %37 = arith.mulf %26, %36 : vector<8x1xf32>
    %38 = arith.subf %34, %37 : vector<8x1xf32>
    %39 = arith.mulf %38, %32 : vector<8x1xf32>
    %40 = arith.subf %20, %8 : vector<8x1xf32>
    %c8_i32 = arith.constant 8 : i32
    %41 = arith.muli %arg0, %c8_i32 : i32
    %42 = tpu.iota {dimensions = array<i32: 0>} : vector<8x1xi32>
    %43 = vector.broadcast %41 : i32 to vector<8x1xi32>
    %44 = arith.addi %43, %42 : vector<8x1xi32>
    %c8_i32_11 = arith.constant 8 : i32
    %45 = vector.broadcast %c8_i32_11 : i32 to vector<8x1xi32>
    %46 = arith.cmpi slt, %44, %45 : vector<8x1xi32>
    %cst_12 = arith.constant 0.000000e+00 : f32
    %47 = vector.broadcast %cst_12 : f32 to vector<8x1xf32>
    %48 = arith.select %46, %40, %47 : vector<8x1xi1>, vector<8x1xf32>
    %cst_13 = arith.constant 0.000000e+00 : f32
    %49 = vector.broadcast %cst_13 : f32 to vector<8x1xf32>
    %50 = arith.select %46, %39, %49 : vector<8x1xi1>, vector<8x1xf32>
    %51 = vector.shape_cast %48 : vector<8x1xf32> to vector<1x8x1xf32>
    %cst_14 = arith.constant dense<0.000000e+00> : vector<1xf32>
    %52 = vector.multi_reduction <add>, %51, %cst_14 [1, 2] : vector<1x8x1xf32> to vector<1xf32>
    %53 = vector.shape_cast %52 : vector<1xf32> to vector<1x1x1xf32>
    %54 = vector.extract %53[0, 0, 0] : f32 from vector<1x1x1xf32>
    %c0_15 = arith.constant 0 : index
    %c0_16 = arith.constant 0 : index
    %55 = memref.load %arg3[%c0_15, %c0_16] : memref<1x2xf32, #tpu.memory_space<smem>>
    memref.store %54, %arg3[%c0_15, %c0_16] : memref<1x2xf32, #tpu.memory_space<smem>>
    %56 = vector.shape_cast %50 : vector<8x1xf32> to vector<1x8x1xf32>
    %cst_17 = arith.constant dense<0.000000e+00> : vector<1xf32>
    %57 = vector.multi_reduction <add>, %56, %cst_17 [1, 2] : vector<1x8x1xf32> to vector<1xf32>
    %58 = vector.shape_cast %57 : vector<1xf32> to vector<1x1x1xf32>
    %59 = vector.extract %58[0, 0, 0] : f32 from vector<1x1x1xf32>
    %c0_18 = arith.constant 0 : index
    %c1 = arith.constant 1 : index
    %60 = memref.load %arg3[%c0_18, %c1] : memref<1x2xf32, #tpu.memory_space<smem>>
    memref.store %59, %arg3[%c0_18, %c1] : memref<1x2xf32, #tpu.memory_space<smem>>
    return
  }
  func.func @transform_0(%arg0: i32) -> (i32, i32) {
    %c0_i32 = arith.constant 0 : i32
    %c0_i32_0 = arith.constant 0 : i32
    return %arg0, %c0_i32 : i32, i32
  }
  func.func @transform_1(%arg0: i32) -> (i32, i32) {
    %c0_i32 = arith.constant 0 : i32
    %c0_i32_0 = arith.constant 0 : i32
    return %arg0, %c0_i32 : i32, i32
  }
  func.func @transform_2(%arg0: i32) -> (i32, i32) {
    %c0_i32 = arith.constant 0 : i32
    %c0_i32_0 = arith.constant 0 : i32
    return %arg0, %c0_i32 : i32, i32
  }
}

</mosaic_0001>

<llo_original>
// kernel: tpu_custom_call.1
$region0: #{tpu_custom_call.1}
  #allocation0 [shape = 'u32[]', space=smem, size = 0x4, offset = 0x4, fixed_abs, tag = 'smem constant byte address 0x4 - core index']
  #allocation1 [shape = 'u32[144,128]{1,0:T(1,128)}', space=vmem, size = 0x12000, scoped, tag = 'internal scratch']
  %s0 = inlined_call_operand.vmem [shape: f32[8,32], index: 0, kind: input, shape index: {}]
  %s1 = inlined_call_operand.vmem [shape: s32[8,1], index: 1, kind: input, shape index: {}]
  %s2 = inlined_call_operand.hbm [shape: f32[1,2], index: 2, kind: output, shape index: {}]
  %s3 = sld [smem:[#allocation0]]
  $region18: #{tpu_custom_call.1} parent=0
    _
  %s5 = ssub.s32 1, %s3
  %s6 = scalar_select 0, %s5, %s3
  $region1: #{tpu_custom_call.1} parent=0
    #allocation2 [shape = 'u8[512]{0}', space=smem, size = 0x200, scoped, tag = 'output window, operand 0, single buffered']
    #allocation3 [shape = 's32[1]{0}', space=sflag, size = 0x4, scoped, tag = 'scoped memory for tpu_custom_call.1']
    %7 = vsyncpa [#allocation3], 0
    // Predicated region
    $region2: #{tpu_custom_call.1} parent=1 // pred_check
      _
    $region3: #{tpu_custom_call.1} parent=1 // pred_check_branch
      %9 = sbr.rel (0) target = $region5
    $region4: #{tpu_custom_call.1} parent=1 // pred_region
      _
    $region5: #{tpu_custom_call.1} parent=1 // pred_fallthru
      _
    // Predicated region
    $region6: #{tpu_custom_call.1} parent=1 // pred_check
      _
    $region7: #{tpu_custom_call.1} parent=1 // pred_check_branch
      %11 = sbr.rel (0) target = $region9
    $region8: #{tpu_custom_call.1} parent=1 // pred_region
      _
    $region9: #{tpu_custom_call.1} parent=1 // pred_fallthru
      _
    %v12 = vld [vmem:[%s0] sm:$0xff]
    %v13 = vld [vmem:[%s1] sm:$0xff]
    %v14 = vlaneseq
    %v15 = vand.u32 %v14, 127
    %16 = vset.pattern.permute.xlu0 0
    %17 = vperm.xlu0 %16, %v13
    %v18 = vpop.permute.xlu0 %17
    %vm19 = vcmp.eq.s32.totalorder %v15, %v18
    %v20 = vsel %vm19, %v12, 0.0
    %vm21 = vcmask 261120
    %v22 = vsel %vm21, %v20, 0.0
    %23 = vadd.xlane.f32.xlu0 %v22
    %v24 = vpop.xlane.xlu0 %23
    %v25 = vsel %vm21, %v12, -inf
    %26 = vmax.xlane.f32.xlu0 %v25
    %v27 = vpop.xlane.xlu0 %26
    %v28 = vsub.f32 %v12, %v27
    %v29 = vmul.f32 %v28, 1.442695
    %v30 = vpow.pop %v29
    %v31 = vsel %vm21, %v30, 0.0
    %32 = vadd.xlane.f32.xlu0 %v31
    %v33 = vpop.xlane.xlu0 %32
    %v34 = vmul.f32 %v30, %v28
    %v35 = vsel %vm21, %v34, 0.0
    %36 = vadd.xlane.f32.xlu0 %v35
    %v37 = vpop.xlane.xlu0 %36
    %v38 = vlog2.pop %v33
    %v39 = vmul.f32 %v38, 0.6931472
    %v40 = vadd.f32 %v27, %v39
    %v41 = vrcp.pop %v33
    %v42 = vmul.f32 1.0, %v41
    %v43 = vmul.f32 %v37, %v42
    %v44 = vsub.f32 %v43, %v39
    %v45 = vsub.f32 %v24, %v40
    %v46 = vmul.f32 %v45, 1.442695
    %v47 = vpow.pop %v46
    %v48 = vsub.f32 1.0, %v47
    %v49 = vadd.f32 %v48, 0.0001
    %v50 = vrcp.pop %v49
    %v51 = vmul.f32 1.0, %v50
    %v52 = vlog2.pop %v49
    %v53 = vmul.f32 %v52, 0.6931472
    %v54 = vsub.f32 %v44, %v53
    %v55 = vsub.f32 %v45, %v53
    %v56 = vmul.f32 %v47, %v55
    %v57 = vsub.f32 %v54, %v56
    %v58 = vmul.f32 %v57, %v51
    %v59 = vsub.f32 %v40, %v24
    %s60 = smul.u32 0, 8
    %v61 = vlaneseq
    %v62 = vshrl.u32 %v61, 7
    %v63 = vstv %s60
    %v64 = vadd.s32 %v63, %v62
    %vm65 = vcmp.lt.s32.totalorder %v64, 8
    %v66 = vsel %vm65, %v59, 0.0
    %v67 = vsel %vm65, %v58, 0.0
    %vm68 = vcmask 7168
    %v69 = vsel %vm68, %v66, 0.0
    %70 = vadd.xlane.f32.xlu0 %v69
    %v71 = vpop.xlane.xlu0 %70
    %v72 = vrot.slane %v71, 4
    %v73 = vadd.f32 %v71, %v72
    %v74 = vrot.slane %v73, 2
    %v75 = vadd.f32 %v73, %v74
    %v76 = vrot.slane %v75, 1
    %v77 = vadd.f32 %v75, %v76
    %s78 = vtos %v77
    %s79 = scalar_lea.smem [#allocation2], 0
    %80 = sst [smem:[%s79]] %s78
    %v81 = vsel %vm68, %v67, 0.0
    %82 = vadd.xlane.f32.xlu0 %v81
    %v83 = vpop.xlane.xlu0 %82
    %v84 = vrot.slane %v83, 4
    %v85 = vadd.f32 %v83, %v84
    %v86 = vrot.slane %v85, 2
    %v87 = vadd.f32 %v85, %v86
    %v88 = vrot.slane %v87, 1
    %v89 = vadd.f32 %v87, %v88
    %s90 = vtos %v89
    %s91 = scalar_lea.smem [#allocation2], 1
    %92 = sst [smem:[%s91]] %s90
    // Predicated region
    $region10: #{tpu_custom_call.1} parent=1 // pred_check
      _
    $region11: #{tpu_custom_call.1} parent=1 // pred_check_branch
      %94 = sbr.rel (0) target = $region13
    $region12: #{tpu_custom_call.1} parent=1 // pred_region
      %s96 = ssub.s32 16, 16
      %97 = vsyncadd [#allocation3], %s96
      %100 = dma.smem_to_hbm [#allocation2], 16, %s2, [#allocation3]
    $region13: #{tpu_custom_call.1} parent=1 // pred_fallthru
      _
    // Predicated region
    $region14: #{tpu_custom_call.1} parent=1 // pred_check
      _
    $region15: #{tpu_custom_call.1} parent=1 // pred_check_branch
      %102 = sbr.rel (0) target = $region17
    $region16: #{tpu_custom_call.1} parent=1 // pred_region
      %103 = dma.done [#allocation3], 16
    $region17: #{tpu_custom_call.1} parent=1 // pred_fallthru
      _
    %104 = sfence
    %105 = vsyncpa [#allocation3], 1

</llo_original>
